<compile_context>
chip_gen: v5e
topology: v5e:2x2
jax: 0.10.0
libtpu: 0.0.40
codegen_flags: <defaults>
</compile_context>

<pallas_src>
import functools
import math

import jax
import jax.numpy as jnp
from jax.experimental import pallas as pl
from jax.experimental.pallas import tpu as pltpu


def _pma_kernel(x_ref, wk_ref, wv_ref, wo_ref, hm_ref, hmt_ref, vec_ref, o_ref):
    # x_ref:   (B_blk, n, f)  activation tile (f = num_seeds * dim on lanes)
    # wk/wv/wo:(f, f)         block-diagonal kron(I_s, W^T) projection weights
    # hm_ref:  (f, s*H)       head-sum selection matrix, 1/sqrt(dim) pre-folded in
    # hmt_ref: (s*H, f)       head-broadcast selection matrix
    # vec_ref: (8, f) f32     rows: bk, bv, bo, M(seeds), BN0 scale, BN0 bias,
    #                               BN1 scale, BN1 bias
    bb, n, f = x_ref.shape
    x2 = x_ref[...].reshape(bb * n, f)                 # sublane-aligned merge (n % 8 == 0)

    bk = vec_ref[0:1, :]
    bv = vec_ref[1:2, :]
    bo = vec_ref[2:3, :]
    m = vec_ref[3:4, :]
    s0 = vec_ref[4:5, :]
    b0 = vec_ref[5:6, :]
    s1 = vec_ref[6:7, :]
    b1 = vec_ref[7:8, :]

    # K / V projections for the whole batch block at once (MXU M = bb*n rows).
    k = jnp.dot(x2, wk_ref[...], preferred_element_type=jnp.float32) + bk
    v = jnp.dot(x2, wv_ref[...], preferred_element_type=jnp.float32) + bv

    # logits[i, j*H + h] = <K[i, seed j, head h], M[seed j, head h]> / sqrt(dim)
    logits = jnp.dot(k * m, hm_ref[...], preferred_element_type=jnp.float32)  # (bb*n, sH)
    sh = logits.shape[-1]
    logits3 = logits.reshape(bb, n, sh)

    # softmax over the set axis (axis=1), per batch element
    lmax = jnp.max(logits3, axis=1, keepdims=True)
    p = jnp.exp(logits3 - lmax)
    denom = jnp.sum(p, axis=1, keepdims=True)
    a3 = p * pl.reciprocal(denom, approx=True)                                 # (bb, n, sH)

    # broadcast each head weight across its dim_split features, weight V, reduce n
    a_full = jnp.dot(a3.reshape(bb * n, sh), hmt_ref[...],
                     preferred_element_type=jnp.float32)                        # (bb*n, f)
    o_att = m + jnp.sum((a_full * v).reshape(bb, n, f), axis=1)                 # (bb, f)

    # BatchNorm1d #0 (eval semantics, folded)
    o0 = o_att * s0 + b0

    # O + relu(fc_o(O))  -- fc_o now runs with M = bb rows
    h = jnp.dot(o0, wo_ref[...], preferred_element_type=jnp.float32) + bo
    o1 = o0 + jnp.maximum(h, 0.0)

    # BatchNorm1d #1 (eval semantics, folded); single cast at the store
    o_ref[...] = (o1 * s1 + b1).astype(o_ref.dtype)


def _pick_block_bs(bs, n, target_rows=256):
    """Largest divisor of bs such that B_blk*n ~ target_rows, B_blk a multiple of 8
    (dense output stores) and, when bs allows it, >= 2 grid steps (v7x megacore)."""
    cap = max(1, target_rows // max(n, 1))
    if bs >= 4:
        cap = min(cap, max(1, bs // 2))
    best = None
    for b in range(1, min(bs, cap) + 1):
        if bs % b == 0 and (b % 8 == 0 or b == bs):
            best = b
    return best if best is not None else bs


def fold_params(m_param, wk, bk, wv, bv, wo, bo,
                g0, be0, mu0, var0, g1, be1, mu1, var1,
                *, num_heads, weight_dtype=jnp.float32, eps=1e-5):
    """One-time weight preprocessing (hoisted out of the per-call forward)."""
    s, dim = m_param.shape[-2], m_param.shape[-1]
    assert dim % num_heads == 0
    ds = dim // num_heads
    f = s * dim

    eye_s = jnp.eye(s, dtype=jnp.float32)
    # Per-seed Linear as block-diagonal weight: y = x @ kron(I_s, W^T) + tile(b, s)
    wk_bd = jnp.kron(eye_s, wk.T.astype(jnp.float32)).astype(weight_dtype)
    wv_bd = jnp.kron(eye_s, wv.T.astype(jnp.float32)).astype(weight_dtype)
    wo_bd = jnp.kron(eye_s, wo.T.astype(jnp.float32)).astype(weight_dtype)

    # Head selection: hmask[d, h] = 1 iff feature d belongs to head h.
    head_of = jnp.arange(dim) // ds
    hmask = (head_of[:, None] == jnp.arange(num_heads)[None, :]).astype(jnp.float32)
    hm = (jnp.kron(eye_s, hmask) * (1.0 / math.sqrt(dim))).astype(jnp.float32)  # (f, s*H)
    hmt = jnp.kron(eye_s, hmask.T).astype(jnp.float32)                           # (s*H, f)

    # Fold BatchNorm1d (eval mode) into per-feature scale / bias (kept in f32).
    scale0 = g0 / jnp.sqrt(var0 + eps)
    bias0 = be0 - mu0 * scale0
    scale1 = g1 / jnp.sqrt(var1 + eps)
    bias1 = be1 - mu1 * scale1

    vecs = jnp.stack([
        jnp.tile(bk, s), jnp.tile(bv, s), jnp.tile(bo, s),
        m_param.reshape(f),
        scale0, bias0, scale1, bias1,
    ], axis=0).astype(jnp.float32)                                                # (8, f)

    return wk_bd, wv_bd, wo_bd, hm, hmt, vecs


@functools.partial(jax.jit, static_argnames=("block_bs",))
def transformer_router_forward(x, wk_bd, wv_bd, wo_bd, hm, hmt, vecs, *, block_bs=None):
    """x: (bs, n, num_seeds, dim). Returns (bs, num_seeds, dim)."""
    bs, n, s, dim = x.shape
    f = s * dim
    sh = hm.shape[-1]
    dtype = x.dtype

    bb = block_bs if block_bs is not None else _pick_block_bs(bs, n)
    assert bs % bb == 0

    x3 = x.reshape(bs, n, f)       # free, contiguous reshape (no HBM transpose)

    # Explicit scoped-VMEM budget: double-buffered tiles + resident weights,
    # floored at 16 MiB (v5e default) and capped at 32 MiB (valid everywhere).
    est = 2 * (bb * n * f * x.dtype.itemsize
               + bb * f * x.dtype.itemsize
               + 3 * f * f * wk_bd.dtype.itemsize
               + 2 * f * sh * 4
               + 8 * f * 4) + 8 * bb * n * f * 4
    vmem_limit = int(min(max(2 * est, 16 << 20), 32 << 20))

    res = lambda b: (0, 0)         # resident (grid-invariant) operands
    out = pl.pallas_call(
        _pma_kernel,
        out_shape=jax.ShapeDtypeStruct((bs, f), dtype),
        grid_spec=pltpu.PrefetchScalarGridSpec(
            num_scalar_prefetch=0,
            grid=(bs // bb,),
            in_specs=[
                pl.BlockSpec((bb, n, f), lambda b: (b, 0, 0)),  # x (streamed)
                pl.BlockSpec((f, f), res),                      # wk_bd
                pl.BlockSpec((f, f), res),                      # wv_bd
                pl.BlockSpec((f, f), res),                      # wo_bd
                pl.BlockSpec((f, sh), res),                     # head-sum (scaled)
                pl.BlockSpec((sh, f), res),                     # head-broadcast
                pl.BlockSpec((8, f), res),                      # coalesced vectors (f32)
            ],
            out_specs=pl.BlockSpec((bb, f), lambda b: (b, 0)),
        ),
        compiler_params=pltpu.CompilerParams(
            dimension_semantics=("parallel",),
            vmem_limit_bytes=vmem_limit),
    )(x3, wk_bd, wv_bd, wo_bd, hm, hmt, vecs)

    return out.reshape(bs, s, dim)


def _pma_reference(x, m_param, wk, bk, wv, bv, wo, bo,
                   g0, be0, mu0, var0, g1, be1, mu1, var1, num_heads, eps=1e-5):
    """Pure-JAX reference of PMA.forward (eval-mode BatchNorm1d)."""
    bs, n, s, dim = x.shape
    ds = dim // num_heads
    hp = jax.lax.Precision.HIGHEST
    K = jnp.einsum("bnsd,ed->bnse", x, wk, precision=hp) + bk
    V = jnp.einsum("bnsd,ed->bnse", x, wv, precision=hp) + bv
    Kh = K.reshape(bs, n, s, num_heads, ds)
    Vh = V.reshape(bs, n, s, num_heads, ds)
    Mh = m_param.reshape(s, num_heads, ds)
    S = jnp.einsum("bnshd,shd->bnsh", Kh, Mh, precision=hp) / math.sqrt(dim)
    A = jax.nn.softmax(S, axis=1)                       # softmax over the set axis
    O = Mh[None] + jnp.einsum("bnsh,bnshd->bshd", A, Vh, precision=hp)
    O = O.reshape(bs, s * dim)
    O = (O - mu0) / jnp.sqrt(var0 + eps) * g0 + be0
    O = O.reshape(bs, s, dim)
    H = jnp.einsum("bsd,ed->bse", O, wo, precision=hp) + bo
    O = O + jnp.maximum(H, 0.0)
    O = O.reshape(bs, s * dim)
    O = (O - mu1) / jnp.sqrt(var1 + eps) * g1 + be1
    return O.reshape(bs, s, dim)


if __name__ == "__main__":
    key = jax.random.PRNGKey(0)
    ks = jax.random.split(key, 16)

    bs, n = 32, 8
    dim, num_heads, num_ind = 16, 4, 4          # TransformerRouter(num_ind=4, num_heads=4, dim=16)
    s = num_ind
    f = s * dim

    x = jax.random.normal(ks[0], (bs, n, s, dim), jnp.float32)

    bound = 1.0 / math.sqrt(dim)
    m_param = jax.random.uniform(ks[1], (1, s, dim), jnp.float32, -bound, bound)
    wk = jax.random.uniform(ks[2], (dim, dim), jnp.float32, -bound, bound)
    bk = jax.random.uniform(ks[3], (dim,), jnp.float32, -bound, bound)
    wv = jax.random.uniform(ks[4], (dim, dim), jnp.float32, -bound, bound)
    bv = jax.random.uniform(ks[5], (dim,), jnp.float32, -bound, bound)
    wo = jax.random.uniform(ks[6], (dim, dim), jnp.float32, -bound, bound)
    bo = jax.random.uniform(ks[7], (dim,), jnp.float32, -bound, bound)

    g0 = 1.0 + 0.1 * jax.random.normal(ks[8], (f,), jnp.float32)
    be0 = 0.1 * jax.random.normal(ks[9], (f,), jnp.float32)
    mu0 = 0.1 * jax.random.normal(ks[10], (f,), jnp.float32)
    var0 = jnp.abs(1.0 + 0.1 * jax.random.normal(ks[11], (f,), jnp.float32))
    g1 = 1.0 + 0.1 * jax.random.normal(ks[12], (f,), jnp.float32)
    be1 = 0.1 * jax.random.normal(ks[13], (f,), jnp.float32)
    mu1 = 0.1 * jax.random.normal(ks[14], (f,), jnp.float32)
    var1 = jnp.abs(1.0 + 0.1 * jax.random.normal(ks[15], (f,), jnp.float32))

    # One-time weight preprocessing (hoisted out of the forward call).
    prepared = fold_params(m_param, wk, bk, wv, bv, wo, bo,
                           g0, be0, mu0, var0, g1, be1, mu1, var1,
                           num_heads=num_heads, weight_dtype=x.dtype)

    out = transformer_router_forward(x, *prepared)
    out = jax.block_until_ready(out)

    ref = _pma_reference(
        x, m_param, wk, bk, wv, bv, wo, bo,
        g0, be0, mu0, var0, g1, be1, mu1, var1, num_heads)

    assert out.shape == (bs, s, dim)
    max_err = float(jnp.max(jnp.abs(out - ref)))
    assert jnp.allclose(out, ref, atol=5e-3, rtol=5e-3), max_err

    print("KERNEL_OK")
</pallas_src>

<mosaic_0001>
module attributes {stable_mosaic.version = 11 : i64} {
  func.func @_pma_kernel(%arg0: i32, %arg1: memref<16x8x64xf32, #tpu.memory_space<vmem>>, %arg2: memref<64x64xf32, #tpu.memory_space<vmem>>, %arg3: memref<64x64xf32, #tpu.memory_space<vmem>>, %arg4: memref<64x64xf32, #tpu.memory_space<vmem>>, %arg5: memref<64x16xf32, #tpu.memory_space<vmem>>, %arg6: memref<16x64xf32, #tpu.memory_space<vmem>>, %arg7: memref<8x64xf32, #tpu.memory_space<vmem>>, %arg8: memref<16x64xf32, #tpu.memory_space<vmem>>) attributes {dimension_semantics = [#tpu.dimension_semantics<parallel>], iteration_bounds = array<i64: 2>, scalar_prefetch = 0 : i64, scratch_operands = 0 : i64, tpu.core_type = #tpu.core_type<tc>, window_params = [{transform_indices = @transform_0, window_bounds = array<i64: 16, 8, 64>}, {pipeline_mode = #tpu.pipeline_mode<synchronous>, transform_indices = @transform_1, window_bounds = array<i64: 64, 64>}, {pipeline_mode = #tpu.pipeline_mode<synchronous>, transform_indices = @transform_2, window_bounds = array<i64: 64, 64>}, {pipeline_mode = #tpu.pipeline_mode<synchronous>, transform_indices = @transform_3, window_bounds = array<i64: 64, 64>}, {pipeline_mode = #tpu.pipeline_mode<synchronous>, transform_indices = @transform_4, window_bounds = array<i64: 64, 16>}, {pipeline_mode = #tpu.pipeline_mode<synchronous>, transform_indices = @transform_5, window_bounds = array<i64: 16, 64>}, {pipeline_mode = #tpu.pipeline_mode<synchronous>, transform_indices = @transform_6, window_bounds = array<i64: 8, 64>}, {transform_indices = @transform_7, window_bounds = array<i64: 16, 64>}]} {
    %c0 = arith.constant 0 : index
    %c0_0 = arith.constant 0 : index
    %c0_1 = arith.constant 0 : index
    %0 = vector.load %arg1[%c0, %c0_0, %c0_1] : memref<16x8x64xf32, #tpu.memory_space<vmem>>, vector<16x8x64xf32>
    %1 = vector.shape_cast %0 : vector<16x8x64xf32> to vector<128x64xf32>
    %c0_2 = arith.constant 0 : index
    %c0_3 = arith.constant 0 : index
    %2 = vector.load %arg7[%c0_2, %c0_3] : memref<8x64xf32, #tpu.memory_space<vmem>>, vector<1x64xf32>
    %c1 = arith.constant 1 : index
    %c0_4 = arith.constant 0 : index
    %3 = vector.load %arg7[%c1, %c0_4] : memref<8x64xf32, #tpu.memory_space<vmem>>, vector<1x64xf32>
    %c2 = arith.constant 2 : index
    %c0_5 = arith.constant 0 : index
    %4 = vector.load %arg7[%c2, %c0_5] : memref<8x64xf32, #tpu.memory_space<vmem>>, vector<1x64xf32>
    %c3 = arith.constant 3 : index
    %c0_6 = arith.constant 0 : index
    %5 = vector.load %arg7[%c3, %c0_6] : memref<8x64xf32, #tpu.memory_space<vmem>>, vector<1x64xf32>
    %c4 = arith.constant 4 : index
    %c0_7 = arith.constant 0 : index
    %6 = vector.load %arg7[%c4, %c0_7] : memref<8x64xf32, #tpu.memory_space<vmem>>, vector<1x64xf32>
    %c5 = arith.constant 5 : index
    %c0_8 = arith.constant 0 : index
    %7 = vector.load %arg7[%c5, %c0_8] : memref<8x64xf32, #tpu.memory_space<vmem>>, vector<1x64xf32>
    %c6 = arith.constant 6 : index
    %c0_9 = arith.constant 0 : index
    %8 = vector.load %arg7[%c6, %c0_9] : memref<8x64xf32, #tpu.memory_space<vmem>>, vector<1x64xf32>
    %c7 = arith.constant 7 : index
    %c0_10 = arith.constant 0 : index
    %9 = vector.load %arg7[%c7, %c0_10] : memref<8x64xf32, #tpu.memory_space<vmem>>, vector<1x64xf32>
    %c0_11 = arith.constant 0 : index
    %c0_12 = arith.constant 0 : index
    %10 = vector.load %arg2[%c0_11, %c0_12] : memref<64x64xf32, #tpu.memory_space<vmem>>, vector<64x64xf32>
    %cst = arith.constant dense<0.000000e+00> : vector<128x64xf32>
    %11 = tpu.matmul %1, %10, %cst {dimension_numbers = #tpu.dot_dimension_numbers<[1], [0], [0], [1], [0, 0, 1, 1], [], []>} : vector<128x64xf32>, vector<64x64xf32>, vector<128x64xf32> -> vector<128x64xf32>
    %12 = vector.broadcast %2 : vector<1x64xf32> to vector<128x64xf32>
    %13 = arith.addf %11, %12 : vector<128x64xf32>
    %c0_13 = arith.constant 0 : index
    %c0_14 = arith.constant 0 : index
    %14 = vector.load %arg3[%c0_13, %c0_14] : memref<64x64xf32, #tpu.memory_space<vmem>>, vector<64x64xf32>
    %cst_15 = arith.constant dense<0.000000e+00> : vector<128x64xf32>
    %15 = tpu.matmul %1, %14, %cst_15 {dimension_numbers = #tpu.dot_dimension_numbers<[1], [0], [0], [1], [0, 0, 1, 1], [], []>} : vector<128x64xf32>, vector<64x64xf32>, vector<128x64xf32> -> vector<128x64xf32>
    %16 = vector.broadcast %3 : vector<1x64xf32> to vector<128x64xf32>
    %17 = arith.addf %15, %16 : vector<128x64xf32>
    %18 = vector.broadcast %5 : vector<1x64xf32> to vector<128x64xf32>
    %19 = arith.mulf %13, %18 : vector<128x64xf32>
    %c0_16 = arith.constant 0 : index
    %c0_17 = arith.constant 0 : index
    %20 = vector.load %arg5[%c0_16, %c0_17] : memref<64x16xf32, #tpu.memory_space<vmem>>, vector<64x16xf32>
    %cst_18 = arith.constant dense<0.000000e+00> : vector<128x16xf32>
    %21 = tpu.matmul %19, %20, %cst_18 {dimension_numbers = #tpu.dot_dimension_numbers<[1], [0], [0], [1], [0, 0, 1, 1], [], []>} : vector<128x64xf32>, vector<64x16xf32>, vector<128x16xf32> -> vector<128x16xf32>
    %22 = vector.shape_cast %21 : vector<128x16xf32> to vector<16x8x16xf32>
    %cst_19 = arith.constant dense<0xFF800000> : vector<16x16xf32>
    %23 = vector.multi_reduction <maximumf>, %22, %cst_19 [1] : vector<16x8x16xf32> to vector<16x16xf32>
    %24 = vector.shape_cast %23 : vector<16x16xf32> to vector<16x1x16xf32>
    %25 = vector.broadcast %24 : vector<16x1x16xf32> to vector<16x8x16xf32>
    %26 = arith.subf %22, %25 : vector<16x8x16xf32>
    %27 = math.exp %26 : vector<16x8x16xf32>
    %cst_20 = arith.constant dense<0.000000e+00> : vector<16x16xf32>
    %28 = vector.multi_reduction <add>, %27, %cst_20 [1] : vector<16x8x16xf32> to vector<16x16xf32>
    %29 = vector.shape_cast %28 : vector<16x16xf32> to vector<16x1x16xf32>
    %30 = tpu.reciprocal %29 {approx = true} : vector<16x1x16xf32> -> vector<16x1x16xf32>
    %31 = vector.broadcast %30 : vector<16x1x16xf32> to vector<16x8x16xf32>
    %32 = arith.mulf %27, %31 : vector<16x8x16xf32>
    %33 = vector.shape_cast %32 : vector<16x8x16xf32> to vector<128x16xf32>
    %c0_21 = arith.constant 0 : index
    %c0_22 = arith.constant 0 : index
    %34 = vector.load %arg6[%c0_21, %c0_22] : memref<16x64xf32, #tpu.memory_space<vmem>>, vector<16x64xf32>
    %cst_23 = arith.constant dense<0.000000e+00> : vector<128x64xf32>
    %35 = tpu.matmul %33, %34, %cst_23 {dimension_numbers = #tpu.dot_dimension_numbers<[1], [0], [0], [1], [0, 0, 1, 1], [], []>} : vector<128x16xf32>, vector<16x64xf32>, vector<128x64xf32> -> vector<128x64xf32>
    %36 = arith.mulf %35, %17 : vector<128x64xf32>
    %37 = vector.shape_cast %36 : vector<128x64xf32> to vector<16x8x64xf32>
    %cst_24 = arith.constant dense<0.000000e+00> : vector<16x64xf32>
    %38 = vector.multi_reduction <add>, %37, %cst_24 [1] : vector<16x8x64xf32> to vector<16x64xf32>
    %39 = vector.broadcast %5 : vector<1x64xf32> to vector<16x64xf32>
    %40 = arith.addf %39, %38 : vector<16x64xf32>
    %41 = vector.broadcast %6 : vector<1x64xf32> to vector<16x64xf32>
    %42 = arith.mulf %40, %41 : vector<16x64xf32>
    %43 = vector.broadcast %7 : vector<1x64xf32> to vector<16x64xf32>
    %44 = arith.addf %42, %43 : vector<16x64xf32>
    %c0_25 = arith.constant 0 : index
    %c0_26 = arith.constant 0 : index
    %45 = vector.load %arg4[%c0_25, %c0_26] : memref<64x64xf32, #tpu.memory_space<vmem>>, vector<64x64xf32>
    %cst_27 = arith.constant dense<0.000000e+00> : vector<16x64xf32>
    %46 = tpu.matmul %44, %45, %cst_27 {dimension_numbers = #tpu.dot_dimension_numbers<[1], [0], [0], [1], [0, 0, 1, 1], [], []>} : vector<16x64xf32>, vector<64x64xf32>, vector<16x64xf32> -> vector<16x64xf32>
    %47 = vector.broadcast %4 : vector<1x64xf32> to vector<16x64xf32>
    %48 = arith.addf %46, %47 : vector<16x64xf32>
    %cst_28 = arith.constant 0.000000e+00 : f32
    %49 = vector.broadcast %cst_28 : f32 to vector<16x64xf32>
    %50 = arith.maximumf %48, %49 : vector<16x64xf32>
    %51 = arith.addf %44, %50 : vector<16x64xf32>
    %52 = vector.broadcast %8 : vector<1x64xf32> to vector<16x64xf32>
    %53 = arith.mulf %51, %52 : vector<16x64xf32>
    %54 = vector.broadcast %9 : vector<1x64xf32> to vector<16x64xf32>
    %55 = arith.addf %53, %54 : vector<16x64xf32>
    %c0_29 = arith.constant 0 : index
    %c0_30 = arith.constant 0 : index
    %56 = vector.load %arg8[%c0_29, %c0_30] : memref<16x64xf32, #tpu.memory_space<vmem>>, vector<16x64xf32>
    tpu.vector_store %arg8[%c0_29, %c0_30], %55 {strides = array<i32>} : memref<16x64xf32, #tpu.memory_space<vmem>>, vector<16x64xf32>,
    return
  }
  func.func @transform_0(%arg0: i32) -> (i32, i32, i32) {
    %c0_i32 = arith.constant 0 : i32
    %c0_i32_0 = arith.constant 0 : i32
    %c0_i32_1 = arith.constant 0 : i32
    return %arg0, %c0_i32, %c0_i32_0 : i32, i32, i32
  }
  func.func @transform_1(%arg0: i32) -> (i32, i32) {
    %c0_i32 = arith.constant 0 : i32
    %c0_i32_0 = arith.constant 0 : i32
    %c0_i32_1 = arith.constant 0 : i32
    return %c0_i32, %c0_i32_0 : i32, i32
  }
  func.func @transform_2(%arg0: i32) -> (i32, i32) {
    %c0_i32 = arith.constant 0 : i32
    %c0_i32_0 = arith.constant 0 : i32
    %c0_i32_1 = arith.constant 0 : i32
    return %c0_i32, %c0_i32_0 : i32, i32
  }
  func.func @transform_3(%arg0: i32) -> (i32, i32) {
    %c0_i32 = arith.constant 0 : i32
    %c0_i32_0 = arith.constant 0 : i32
    %c0_i32_1 = arith.constant 0 : i32
    return %c0_i32, %c0_i32_0 : i32, i32
  }
  func.func @transform_4(%arg0: i32) -> (i32, i32) {
    %c0_i32 = arith.constant 0 : i32
    %c0_i32_0 = arith.constant 0 : i32
    %c0_i32_1 = arith.constant 0 : i32
    return %c0_i32, %c0_i32_0 : i32, i32
  }
  func.func @transform_5(%arg0: i32) -> (i32, i32) {
    %c0_i32 = arith.constant 0 : i32
    %c0_i32_0 = arith.constant 0 : i32
    %c0_i32_1 = arith.constant 0 : i32
    return %c0_i32, %c0_i32_0 : i32, i32
  }
  func.func @transform_6(%arg0: i32) -> (i32, i32) {
    %c0_i32 = arith.constant 0 : i32
    %c0_i32_0 = arith.constant 0 : i32
    %c0_i32_1 = arith.constant 0 : i32
    return %c0_i32, %c0_i32_0 : i32, i32
  }
  func.func @transform_7(%arg0: i32) -> (i32, i32) {
    %c0_i32 = arith.constant 0 : i32
    %c0_i32_0 = arith.constant 0 : i32
    return %arg0, %c0_i32 : i32, i32
  }
}

</mosaic_0001>

<llo_original>
// kernel: transformer_router_forward.1
$region0: #{transformer_router_forward.1}
  #allocation0 [shape = 'u32[]', space=smem, size = 0x4, offset = 0x4, fixed_abs, tag = 'smem constant byte address 0x4 - core index']
  #allocation1 [shape = 'u32[72,128]{1,0:T(1,128)}', space=vmem, size = 0x9000, scoped, tag = 'internal scratch']
  %s0 = inlined_call_operand.vmem [shape: f32[32,8,64], index: 0, kind: input, shape index: {}]
  %s1 = inlined_call_operand.vmem [shape: f32[64,64], index: 1, kind: input, shape index: {}]
  %s2 = inlined_call_operand.vmem [shape: f32[64,64], index: 2, kind: input, shape index: {}]
  %s3 = inlined_call_operand.vmem [shape: f32[64,64], index: 3, kind: input, shape index: {}]
  %s4 = inlined_call_operand.vmem [shape: f32[64,16], index: 4, kind: input, shape index: {}]
  %s5 = inlined_call_operand.vmem [shape: f32[16,64], index: 5, kind: input, shape index: {}]
  %s6 = inlined_call_operand.vmem [shape: f32[8,64], index: 6, kind: input, shape index: {}]
  %s7 = inlined_call_operand.vmem [shape: f32[32,64], index: 7, kind: output, shape index: {}]
  %s8 = sld [smem:[#allocation0]]
  $region61: #{transformer_router_forward.1} parent=0
    _
  %s10 = ssub.s32 1, %s8
  %s11 = scalar_select 0, %s10, %s8
  loop: start=0, step=1, limit=4
  $region2: #{transformer_router_forward.1} parent=0 // loop_pre_header
    _
  $region3: #{transformer_router_forward.1} parent=0 // loop_header
    %s13 = sphi 0, %s17
    %p14 = scmp.ge.s32.totalorder %s13, 4
    %s23 = sphi 0, %s25
    %s26 = sphi 0, %s23
    %s27 = sphi 0, %s26
    %s43 = sphi 0, %s27
    %s47 = sphi 0, %s47
    %s49 = sphi 0, %s47
    %s50 = sphi 0, %s49
    %s64 = sphi 0, %s50
    %s68 = sphi 0, %s68
    %s70 = sphi 0, %s68
    %s71 = sphi 0, %s70
    %s85 = sphi 0, %s71
    %s89 = sphi 0, %s89
    %s91 = sphi 0, %s89
    %s92 = sphi 0, %s91
    %s106 = sphi 0, %s92
    %s110 = sphi 0, %s110
    %s112 = sphi 0, %s110
    %s113 = sphi 0, %s112
    %s127 = sphi 0, %s113
    %s131 = sphi 0, %s131
    %s133 = sphi 0, %s131
    %s134 = sphi 0, %s133
    %s148 = sphi 0, %s134
    %s152 = sphi 0, %s152
    %s154 = sphi 0, %s152
    %s155 = sphi 0, %s154
    %s169 = sphi 0, %s155
    %s175 = sphi 0, %s177
    %s178 = sphi 0, %s175
    %s179 = sphi 0, %s178
    %s195 = sphi 0, %s179
  $region4: #{transformer_router_forward.1} parent=0 // loop_header_branch
    %16 = sbr.rel (%p14) target = $region8
  $region5: #{transformer_router_forward.1} parent=0 // loop_body
    %s18 = ssub.s32 %s13, 1
    %s19 = ssub.s32 %s13, 2
    %s20 = sadd.s32 %s13, 1
    %s21 = ssub.s32 %s13, %s20
    %p22 = scmp.eq.s32.totalorder %s21, 0
    %s24 = sadd.s32 %s23, 1
    %s25 = scalar_select %p22, %s23, %s24
    %p28 = pneg %p22
    %p29 = scmp.eq.s32.totalorder %s13, 1
    %p30 = por %p28, %p29
    %p31 = scmp.ne.s32.totalorder %s23, %s26
    %p32 = scmp.eq.s32.totalorder %s13, 0
    %p33 = por %p31, %p32
    %p34 = scmp.ne.s32.totalorder %s23, %s26
    %p35 = scmp.eq.s32.totalorder %s18, 1
    %p36 = por %p34, %p35
    %p37 = scmp.ne.s32.totalorder %s26, %s27
    %p38 = scmp.eq.s32.totalorder %s18, 0
    %p39 = por %p37, %p38
    %p40 = scmp.ne.s32.totalorder %s26, %s27
    %p41 = scmp.eq.s32.totalorder %s19, 1
    %p42 = por %p40, %p41
    %p44 = scmp.ne.s32.totalorder %s27, %s43
    %p45 = scmp.eq.s32.totalorder %s19, 0
    %p46 = por %p44, %p45
    %s48 = sadd.s32 %s47, 1
    %p51 = scmp.eq.s32.totalorder %s13, 1
    %p52 = scmp.ne.s32.totalorder %s47, %s49
    %p53 = scmp.eq.s32.totalorder %s13, 0
    %p54 = por %p52, %p53
    %p55 = scmp.ne.s32.totalorder %s47, %s49
    %p56 = scmp.eq.s32.totalorder %s18, 1
    %p57 = por %p55, %p56
    %p58 = scmp.ne.s32.totalorder %s49, %s50
    %p59 = scmp.eq.s32.totalorder %s18, 0
    %p60 = por %p58, %p59
    %p61 = scmp.ne.s32.totalorder %s49, %s50
    %p62 = scmp.eq.s32.totalorder %s19, 1
    %p63 = por %p61, %p62
    %p65 = scmp.ne.s32.totalorder %s50, %s64
    %p66 = scmp.eq.s32.totalorder %s19, 0
    %p67 = por %p65, %p66
    %s69 = sadd.s32 %s68, 1
    %p72 = scmp.eq.s32.totalorder %s13, 1
    %p73 = scmp.ne.s32.totalorder %s68, %s70
    %p74 = scmp.eq.s32.totalorder %s13, 0
    %p75 = por %p73, %p74
    %p76 = scmp.ne.s32.totalorder %s68, %s70
    %p77 = scmp.eq.s32.totalorder %s18, 1
    %p78 = por %p76, %p77
    %p79 = scmp.ne.s32.totalorder %s70, %s71
    %p80 = scmp.eq.s32.totalorder %s18, 0
    %p81 = por %p79, %p80
    %p82 = scmp.ne.s32.totalorder %s70, %s71
    %p83 = scmp.eq.s32.totalorder %s19, 1
    %p84 = por %p82, %p83
    %p86 = scmp.ne.s32.totalorder %s71, %s85
    %p87 = scmp.eq.s32.totalorder %s19, 0
    %p88 = por %p86, %p87
    %s90 = sadd.s32 %s89, 1
    %p93 = scmp.eq.s32.totalorder %s13, 1
    %p94 = scmp.ne.s32.totalorder %s89, %s91
    %p95 = scmp.eq.s32.totalorder %s13, 0
    %p96 = por %p94, %p95
    %p97 = scmp.ne.s32.totalorder %s89, %s91
    %p98 = scmp.eq.s32.totalorder %s18, 1
    %p99 = por %p97, %p98
    %p100 = scmp.ne.s32.totalorder %s91, %s92
    %p101 = scmp.eq.s32.totalorder %s18, 0
    %p102 = por %p100, %p101
    %p103 = scmp.ne.s32.totalorder %s91, %s92
    %p104 = scmp.eq.s32.totalorder %s19, 1
    %p105 = por %p103, %p104
    %p107 = scmp.ne.s32.totalorder %s92, %s106
    %p108 = scmp.eq.s32.totalorder %s19, 0
    %p109 = por %p107, %p108
    %s111 = sadd.s32 %s110, 1
    %p114 = scmp.eq.s32.totalorder %s13, 1
    %p115 = scmp.ne.s32.totalorder %s110, %s112
    %p116 = scmp.eq.s32.totalorder %s13, 0
    %p117 = por %p115, %p116
    %p118 = scmp.ne.s32.totalorder %s110, %s112
    %p119 = scmp.eq.s32.totalorder %s18, 1
    %p120 = por %p118, %p119
    %p121 = scmp.ne.s32.totalorder %s112, %s113
    %p122 = scmp.eq.s32.totalorder %s18, 0
    %p123 = por %p121, %p122
    %p124 = scmp.ne.s32.totalorder %s112, %s113
    %p125 = scmp.eq.s32.totalorder %s19, 1
    %p126 = por %p124, %p125
    %p128 = scmp.ne.s32.totalorder %s113, %s127
    %p129 = scmp.eq.s32.totalorder %s19, 0
    %p130 = por %p128, %p129
    %s132 = sadd.s32 %s131, 1
    %p135 = scmp.eq.s32.totalorder %s13, 1
    %p136 = scmp.ne.s32.totalorder %s131, %s133
    %p137 = scmp.eq.s32.totalorder %s13, 0
    %p138 = por %p136, %p137
    %p139 = scmp.ne.s32.totalorder %s131, %s133
    %p140 = scmp.eq.s32.totalorder %s18, 1
    %p141 = por %p139, %p140
    %p142 = scmp.ne.s32.totalorder %s133, %s134
    %p143 = scmp.eq.s32.totalorder %s18, 0
    %p144 = por %p142, %p143
    %p145 = scmp.ne.s32.totalorder %s133, %s134
    %p146 = scmp.eq.s32.totalorder %s19, 1
    %p147 = por %p145, %p146
    %p149 = scmp.ne.s32.totalorder %s134, %s148
    %p150 = scmp.eq.s32.totalorder %s19, 0
    %p151 = por %p149, %p150
    %s153 = sadd.s32 %s152, 1
    %p156 = scmp.eq.s32.totalorder %s13, 1
    %p157 = scmp.ne.s32.totalorder %s152, %s154
    %p158 = scmp.eq.s32.totalorder %s13, 0
    %p159 = por %p157, %p158
    %p160 = scmp.ne.s32.totalorder %s152, %s154
    %p161 = scmp.eq.s32.totalorder %s18, 1
    %p162 = por %p160, %p161
    %p163 = scmp.ne.s32.totalorder %s154, %s155
    %p164 = scmp.eq.s32.totalorder %s18, 0
    %p165 = por %p163, %p164
    %p166 = scmp.ne.s32.totalorder %s154, %s155
    %p167 = scmp.eq.s32.totalorder %s19, 1
    %p168 = por %p166, %p167
    %p170 = scmp.ne.s32.totalorder %s155, %s169
    %p171 = scmp.eq.s32.totalorder %s19, 0
    %p172 = por %p170, %p171
    %s173 = ssub.s32 %s13, %s20
    %p174 = scmp.eq.s32.totalorder %s173, 0
    %s176 = sadd.s32 %s175, 1
    %s177 = scalar_select %p174, %s175, %s176
    %p180 = pneg %p174
    %p181 = scmp.eq.s32.totalorder %s13, 1
    %p182 = por %p180, %p181
    %p183 = scmp.ne.s32.totalorder %s175, %s178
    %p184 = scmp.eq.s32.totalorder %s13, 0
    %p185 = por %p183, %p184
    %p186 = scmp.ne.s32.totalorder %s175, %s178
    %p187 = scmp.eq.s32.totalorder %s18, 1
    %p188 = por %p186, %p187
    %p189 = scmp.ne.s32.totalorder %s178, %s179
    %p190 = scmp.eq.s32.totalorder %s18, 0
    %p191 = por %p189, %p190
    %p192 = scmp.ne.s32.totalorder %s178, %s179
    %p193 = scmp.eq.s32.totalorder %s19, 1
    %p194 = por %p192, %p193
    %p196 = scmp.ne.s32.totalorder %s179, %s195
    %p197 = scmp.eq.s32.totalorder %s19, 0
    %p198 = por %p196, %p197
    %p199 = scmp.le.s32.totalorder 1, %s13
    %p200 = scmp.lt.s32.totalorder %s13, 3
    %p201 = pnand %p199, %p200
    %p202 = pneg %p201
    // Predicated region
    $region9: #{transformer_router_forward.1} parent=5 // pred_check
      _
    $region10: #{transformer_router_forward.1} parent=5 // pred_check_branch
      %204 = sbr.rel (%p201) target = $region12
    $region11: #{transformer_router_forward.1} parent=5 // pred_region
      %s205 = ssub.s32 %s13, 1
      // Predicated region
      $region13: #{transformer_router_forward.1} parent=11 // pred_check
        %p206 = pneg %p60
      $region14: #{transformer_router_forward.1} parent=11 // pred_check_branch
        %208 = sbr.rel (%p206) target = $region16
      $region15: #{transformer_router_forward.1} parent=11 // pred_region
        _
      $region16: #{transformer_router_forward.1} parent=11 // pred_fallthru
        _
      // Predicated region
      $region17: #{transformer_router_forward.1} parent=11 // pred_check
        %p209 = pneg %p81
      $region18: #{transformer_router_forward.1} parent=11 // pred_check_branch
        %211 = sbr.rel (%p209) target = $region20
      $region19: #{transformer_router_forward.1} parent=11 // pred_region
        _
      $region20: #{transformer_router_forward.1} parent=11 // pred_fallthru
        _
      // Predicated region
      $region21: #{transformer_router_forward.1} parent=11 // pred_check
        %p212 = pneg %p102
      $region22: #{transformer_router_forward.1} parent=11 // pred_check_branch
        %214 = sbr.rel (%p212) target = $region24
      $region23: #{transformer_router_forward.1} parent=11 // pred_region
        _
      $region24: #{transformer_router_forward.1} parent=11 // pred_fallthru
        _
      // Predicated region
      $region25: #{transformer_router_forward.1} parent=11 // pred_check
        %p215 = pneg %p123
      $region26: #{transformer_router_forward.1} parent=11 // pred_check_branch
        %217 = sbr.rel (%p215) target = $region28
      $region27: #{transformer_router_forward.1} parent=11 // pred_region
        _
      $region28: #{transformer_router_forward.1} parent=11 // pred_fallthru
        _
      // Predicated region
      $region29: #{transformer_router_forward.1} parent=11 // pred_check
        %p218 = pneg %p144
      $region30: #{transformer_router_forward.1} parent=11 // pred_check_branch
        %220 = sbr.rel (%p218) target = $region32
      $region31: #{transformer_router_forward.1} parent=11 // pred_region
        _
      $region32: #{transformer_router_forward.1} parent=11 // pred_fallthru
        _
      // Predicated region
      $region33: #{transformer_router_forward.1} parent=11 // pred_check
        %p221 = pneg %p165
      $region34: #{transformer_router_forward.1} parent=11 // pred_check_branch
        %223 = sbr.rel (%p221) target = $region36
      $region35: #{transformer_router_forward.1} parent=11 // pred_region
        _
      $region36: #{transformer_router_forward.1} parent=11 // pred_fallthru
        _
    $region12: #{transformer_router_forward.1} parent=5 // pred_fallthru
      _
    %p224 = scmp.lt.s32.totalorder %s13, 2
    // Predicated region
    $region37: #{transformer_router_forward.1} parent=5 // pred_check
      %p225 = pneg %p224
    $region38: #{transformer_router_forward.1} parent=5 // pred_check_branch
      %227 = sbr.rel (%p225) target = $region40
    $region39: #{transformer_router_forward.1} parent=5 // pred_region
      // Predicated region
      $region41: #{transformer_router_forward.1} parent=39 // pred_check
        %p228 = pneg %p33
      $region42: #{transformer_router_forward.1} parent=39 // pred_check_branch
        %230 = sbr.rel (%p228) target = $region44
      $region43: #{transformer_router_forward.1} parent=39 // pred_region
        %s231 = smul.u32 16, %s13
        %p232 = scmp.lt.s32.totalorder %s231, 31
        %s233 = scalar_select %p232, %s231, 31
        %s234 = smul.addr %s233, 8
        %s235 = scalar_lea.vmem %s0, %s234
        %s236 = smul.u32 16, %s13
      $region44: #{transformer_router_forward.1} parent=39 // pred_fallthru
        _
    $region40: #{transformer_router_forward.1} parent=5 // pred_fallthru
      _
    %p237 = scmp.le.s32.totalorder 1, %s13
    %p238 = scmp.lt.s32.totalorder %s13, 3
    %p239 = pnand %p237, %p238
    %p240 = pneg %p239
    // Predicated region
    $region45: #{transformer_router_forward.1} parent=5 // pred_check
      _
    $region46: #{transformer_router_forward.1} parent=5 // pred_check_branch
      %242 = sbr.rel (%p239) target = $region48
    $region47: #{transformer_router_forward.1} parent=5 // pred_region
      %s243 = ssub.s32 %s13, 1
      %s244 = smul.u32 16, %s18
      %p245 = scmp.lt.s32.totalorder %s244, 31
      %s246 = scalar_select %p245, %s244, 31
      %s247 = smul.addr %s246, 8
      %s248 = scalar_lea.vmem %s0, %s247
      %p249 = pneg %p39
      %p250 = pneg %p36
      %p251 = pneg %p60
      %p252 = pneg %p57
      %p253 = pneg %p81
      %p254 = pneg %p78
      %p255 = pneg %p102
      %p256 = pneg %p99
      %p257 = pneg %p123
      %p258 = pneg %p120
      %p259 = pneg %p144
      %p260 = pneg %p141
      %p261 = pneg %p165
      %p262 = pneg %p162
      %p263 = pneg %p191
      %p264 = pneg %p188
      %s265 = smul.u32 2, %s18
      %p266 = scmp.lt.s32.totalorder %s265, 3
      %s267 = scalar_select %p266, %s265, 3
      %s268 = smul.addr %s267, 8
      %s269 = scalar_lea.vmem %s7, %s268
      %s270 = smul.u32 16, %s18
      %p271 = scmp.lt.s32.totalorder %s270, 31
      %s272 = scalar_select %p271, %s270, 31
      %s273 = smul.addr %s272, 8
      %s274 = scalar_lea.vmem %s0, %s273
      %s275 = smul.u32 16, %s18
      %s276 = smul.u32 2, %s18
      %p277 = scmp.lt.s32.totalorder %s276, 3
      %s278 = scalar_select %p277, %s276, 3
      %s279 = smul.addr %s278, 8
      %s280 = scalar_lea.vmem %s7, %s279
      %s281 = smul.u32 2, %s18
      %v282 = vld [vmem:[%s274] sm:$0xff]
      %v283 = vld [vmem:[%s274 + $0x8] sm:$0xff]
      %v284 = vld [vmem:[%s274 + $0x10] sm:$0xff]
      %v285 = vld [vmem:[%s274 + $0x18] sm:$0xff]
      %v286 = vld [vmem:[%s274 + $0x20] sm:$0xff]
      %v287 = vld [vmem:[%s274 + $0x28] sm:$0xff]
      %v288 = vld [vmem:[%s274 + $0x30] sm:$0xff]
      %v289 = vld [vmem:[%s274 + $0x38] sm:$0xff]
      %v290 = vld [vmem:[%s274 + $0x40] sm:$0xff]
      %v291 = vld [vmem:[%s274 + $0x48] sm:$0xff]
      %v292 = vld [vmem:[%s274 + $0x50] sm:$0xff]
      %v293 = vld [vmem:[%s274 + $0x58] sm:$0xff]
      %v294 = vld [vmem:[%s274 + $0x60] sm:$0xff]
      %v295 = vld [vmem:[%s274 + $0x68] sm:$0xff]
      %v296 = vld [vmem:[%s274 + $0x70] sm:$0xff]
      %v297 = vld [vmem:[%s274 + $0x78] sm:$0xff]
      %v298 = vld [vmem:[%s6] sm:$0x1]
      %v299 = vld [vmem:[%s6 + $0x1] sm:$0x1]
      %v300 = vld [vmem:[%s6 + $0x2] sm:$0x1]
      %v301 = vld [vmem:[%s6 + $0x3] sm:$0x1]
      %v302 = vld [vmem:[%s6 + $0x4] sm:$0x1]
      %v303 = vld [vmem:[%s6 + $0x5] sm:$0x1]
      %v304 = vld [vmem:[%s6 + $0x6] sm:$0x1]
      %v305 = vld [vmem:[%s6 + $0x7] sm:$0x1]
      %v306 = vld [vmem:[%s1] sm:$0xff]
      %v307 = vld [vmem:[%s1 + $0x8] sm:$0xff]
      %v308 = vld [vmem:[%s1 + $0x10] sm:$0xff]
      %v309 = vld [vmem:[%s1 + $0x18] sm:$0xff]
      %v310 = vld [vmem:[%s1 + $0x20] sm:$0xff]
      %v311 = vld [vmem:[%s1 + $0x28] sm:$0xff]
      %v312 = vld [vmem:[%s1 + $0x30] sm:$0xff]
      %v313 = vld [vmem:[%s1 + $0x38] sm:$0xff]
      %v314 = vperm.slane %v298, 0
      %vm315 = vcmask 523264
      %v317 = vsel %vm315, %v282, 0
      %v320 = vsel %vm315, %v283, 0
      %v323 = vsel %vm315, %v284, 0
      %v326 = vsel %vm315, %v285, 0
      %v329 = vsel %vm315, %v286, 0
      %v332 = vsel %vm315, %v287, 0
      %v335 = vsel %vm315, %v288, 0
      %v338 = vsel %vm315, %v289, 0
      %v341 = vsel %vm315, %v290, 0
      %v344 = vsel %vm315, %v291, 0
      %v347 = vsel %vm315, %v292, 0
      %v350 = vsel %vm315, %v293, 0
      %v353 = vsel %vm315, %v294, 0
      %v356 = vsel %vm315, %v295, 0
      %v359 = vsel %vm315, %v296, 0
      %v362 = vsel %vm315, %v297, 0
      %364 = vmatpush.msra.mxu0 0.0
      %365 = vmatpush.msra.mxu0 0.0
      %366 = vmatpush.msra.mxu0 0.0
      %367 = vmatpush.msra.mxu0 0.0
      %368 = vmatpush.msra.mxu0 0.0
      %369 = vmatpush.msra.mxu0 0.0
      %370 = vmatpush.msra.mxu0 0.0
      %371 = vmatpush.msra.mxu0 0.0
      %372 = vmatpush.msra.mxu0 %v313
      %373 = vmatpush.msra.mxu0 %v312
      %374 = vmatpush.msra.mxu0 %v311
      %375 = vmatpush.msra.mxu0 %v310
      %376 = vmatpush.msra.mxu0 %v309
      %377 = vmatpush.msra.mxu0 %v308
      %378 = vmatpush.msra.mxu0 %v307
      %379 = vmatpush.msra.mxu0 %v306
      %380 = vmatmul.f32.gmra.mxu0 %v317
      %v381 = vpop.f32.mrf.mxu0
      %v382 = vadd.f32 %v314, %v381
      %383 = vmatmul.f32.gmra.mxu0 %v320
      %v384 = vpop.f32.mrf.mxu0
      %v385 = vadd.f32 %v314, %v384
      %386 = vmatmul.f32.gmra.mxu0 %v323
      %v387 = vpop.f32.mrf.mxu0
      %v388 = vadd.f32 %v314, %v387
      %389 = vmatmul.f32.gmra.mxu0 %v326
      %v390 = vpop.f32.mrf.mxu0
      %v391 = vadd.f32 %v314, %v390
      %392 = vmatmul.f32.gmra.mxu0 %v329
      %v393 = vpop.f32.mrf.mxu0
      %v394 = vadd.f32 %v314, %v393
      %395 = vmatmul.f32.gmra.mxu0 %v332
      %v396 = vpop.f32.mrf.mxu0
      %v397 = vadd.f32 %v314, %v396
      %398 = vmatmul.f32.gmra.mxu0 %v335
      %v399 = vpop.f32.mrf.mxu0
      %v400 = vadd.f32 %v314, %v399
      %401 = vmatmul.f32.gmra.mxu0 %v338
      %v402 = vpop.f32.mrf.mxu0
      %v403 = vadd.f32 %v314, %v402
      %404 = vmatmul.f32.gmra.mxu0 %v341
      %v405 = vpop.f32.mrf.mxu0
      %v406 = vadd.f32 %v314, %v405
      %407 = vmatmul.f32.gmra.mxu0 %v344
      %v408 = vpop.f32.mrf.mxu0
      %v409 = vadd.f32 %v314, %v408
      %410 = vmatmul.f32.gmra.mxu0 %v347
      %v411 = vpop.f32.mrf.mxu0
      %v412 = vadd.f32 %v314, %v411
      %413 = vmatmul.f32.gmra.mxu0 %v350
      %v414 = vpop.f32.mrf.mxu0
      %v415 = vadd.f32 %v314, %v414
      %416 = vmatmul.f32.gmra.mxu0 %v353
      %v417 = vpop.f32.mrf.mxu0
      %v418 = vadd.f32 %v314, %v417
      %419 = vmatmul.f32.gmra.mxu0 %v356
      %v420 = vpop.f32.mrf.mxu0
      %v421 = vadd.f32 %v314, %v420
      %422 = vmatmul.f32.gmra.mxu0 %v359
      %v423 = vpop.f32.mrf.mxu0
      %v424 = vadd.f32 %v314, %v423
      %425 = vmatmul.f32.gmra.mxu0 %v362
      %v426 = vpop.f32.mrf.mxu0
      %v427 = vadd.f32 %v314, %v426
      %428 = vdwg.mxu0
      %v429 = vld [vmem:[%s2] sm:$0xff]
      %v430 = vld [vmem:[%s2 + $0x8] sm:$0xff]
      %v431 = vld [vmem:[%s2 + $0x10] sm:$0xff]
      %v432 = vld [vmem:[%s2 + $0x18] sm:$0xff]
      %v433 = vld [vmem:[%s2 + $0x20] sm:$0xff]
      %v434 = vld [vmem:[%s2 + $0x28] sm:$0xff]
      %v435 = vld [vmem:[%s2 + $0x30] sm:$0xff]
      %v436 = vld [vmem:[%s2 + $0x38] sm:$0xff]
      %v437 = vperm.slane %v299, 0
      %438 = vmatpush.msra.mxu0 0.0
      %439 = vmatpush.msra.mxu0 0.0
      %440 = vmatpush.msra.mxu0 0.0
      %441 = vmatpush.msra.mxu0 0.0
      %442 = vmatpush.msra.mxu0 0.0
      %443 = vmatpush.msra.mxu0 0.0
      %444 = vmatpush.msra.mxu0 0.0
      %445 = vmatpush.msra.mxu0 0.0
      %446 = vmatpush.msra.mxu0 %v436
      %447 = vmatpush.msra.mxu0 %v435
      %448 = vmatpush.msra.mxu0 %v434
      %449 = vmatpush.msra.mxu0 %v433
      %450 = vmatpush.msra.mxu0 %v432
      %451 = vmatpush.msra.mxu0 %v431
      %452 = vmatpush.msra.mxu0 %v430
      %453 = vmatpush.msra.mxu0 %v429
      %454 = vmatmul.f32.gmra.mxu0 %v317
      %v455 = vpop.f32.mrf.mxu0
      %v456 = vadd.f32 %v437, %v455
      %457 = vmatmul.f32.gmra.mxu0 %v320
      %v458 = vpop.f32.mrf.mxu0
      %v459 = vadd.f32 %v437, %v458
      %460 = vmatmul.f32.gmra.mxu0 %v323
      %v461 = vpop.f32.mrf.mxu0
      %v462 = vadd.f32 %v437, %v461
      %463 = vmatmul.f32.gmra.mxu0 %v326
      %v464 = vpop.f32.mrf.mxu0
      %v465 = vadd.f32 %v437, %v464
      %466 = vmatmul.f32.gmra.mxu0 %v329
      %v467 = vpop.f32.mrf.mxu0
      %v468 = vadd.f32 %v437, %v467
      %469 = vmatmul.f32.gmra.mxu0 %v332
      %v470 = vpop.f32.mrf.mxu0
      %v471 = vadd.f32 %v437, %v470
      %472 = vmatmul.f32.gmra.mxu0 %v335
      %v473 = vpop.f32.mrf.mxu0
      %v474 = vadd.f32 %v437, %v473
      %475 = vmatmul.f32.gmra.mxu0 %v338
      %v476 = vpop.f32.mrf.mxu0
      %v477 = vadd.f32 %v437, %v476
      %478 = vmatmul.f32.gmra.mxu0 %v341
      %v479 = vpop.f32.mrf.mxu0
      %v480 = vadd.f32 %v437, %v479
      %481 = vmatmul.f32.gmra.mxu0 %v344
      %v482 = vpop.f32.mrf.mxu0
      %v483 = vadd.f32 %v437, %v482
      %484 = vmatmul.f32.gmra.mxu0 %v347
      %v485 = vpop.f32.mrf.mxu0
      %v486 = vadd.f32 %v437, %v485
      %487 = vmatmul.f32.gmra.mxu0 %v350
      %v488 = vpop.f32.mrf.mxu0
      %v489 = vadd.f32 %v437, %v488
      %490 = vmatmul.f32.gmra.mxu0 %v353
      %v491 = vpop.f32.mrf.mxu0
      %v492 = vadd.f32 %v437, %v491
      %493 = vmatmul.f32.gmra.mxu0 %v356
      %v494 = vpop.f32.mrf.mxu0
      %v495 = vadd.f32 %v437, %v494
      %496 = vmatmul.f32.gmra.mxu0 %v359
      %v497 = vpop.f32.mrf.mxu0
      %v498 = vadd.f32 %v437, %v497
      %499 = vmatmul.f32.gmra.mxu0 %v362
      %v500 = vpop.f32.mrf.mxu0
      %v501 = vadd.f32 %v437, %v500
      %502 = vdwg.mxu0
      %v503 = vperm.slane %v301, 0
      %v504 = vmul.f32 %v382, %v503
      %v505 = vmul.f32 %v385, %v503
      %v506 = vmul.f32 %v388, %v503
      %v507 = vmul.f32 %v391, %v503
      %v508 = vmul.f32 %v394, %v503
      %v509 = vmul.f32 %v397, %v503
      %v510 = vmul.f32 %v400, %v503
      %v511 = vmul.f32 %v403, %v503
      %v512 = vmul.f32 %v406, %v503
      %v513 = vmul.f32 %v409, %v503
      %v514 = vmul.f32 %v412, %v503
      %v515 = vmul.f32 %v415, %v503
      %v516 = vmul.f32 %v418, %v503
      %v517 = vmul.f32 %v421, %v503
      %v518 = vmul.f32 %v424, %v503
      %v519 = vmul.f32 %v427, %v503
      %v520 = vld [vmem:[%s4] sm:$0xff]
      %v521 = vld [vmem:[%s4 + $0x8] sm:$0xff]
      %v522 = vld [vmem:[%s4 + $0x10] sm:$0xff]
      %v523 = vld [vmem:[%s4 + $0x18] sm:$0xff]
      %v524 = vld [vmem:[%s4 + $0x20] sm:$0xff]
      %v525 = vld [vmem:[%s4 + $0x28] sm:$0xff]
      %v526 = vld [vmem:[%s4 + $0x30] sm:$0xff]
      %v527 = vld [vmem:[%s4 + $0x38] sm:$0xff]
      %v529 = vsel %vm315, %v504, 0
      %v532 = vsel %vm315, %v505, 0
      %v535 = vsel %vm315, %v506, 0
      %v538 = vsel %vm315, %v507, 0
      %v541 = vsel %vm315, %v508, 0
      %v544 = vsel %vm315, %v509, 0
      %v547 = vsel %vm315, %v510, 0
      %v550 = vsel %vm315, %v511, 0
      %v553 = vsel %vm315, %v512, 0
      %v556 = vsel %vm315, %v513, 0
      %v559 = vsel %vm315, %v514, 0
      %v562 = vsel %vm315, %v515, 0
      %v565 = vsel %vm315, %v516, 0
      %v568 = vsel %vm315, %v517, 0
      %v571 = vsel %vm315, %v518, 0
      %v574 = vsel %vm315, %v519, 0
      %576 = vmatpush.msra.mxu0 0.0
      %577 = vmatpush.msra.mxu0 0.0
      %578 = vmatpush.msra.mxu0 0.0
      %579 = vmatpush.msra.mxu0 0.0
      %580 = vmatpush.msra.mxu0 0.0
      %581 = vmatpush.msra.mxu0 0.0
      %582 = vmatpush.msra.mxu0 0.0
      %583 = vmatpush.msra.mxu0 0.0
      %584 = vmatpush.msra.mxu0 %v527
      %585 = vmatpush.msra.mxu0 %v526
      %586 = vmatpush.msra.mxu0 %v525
      %587 = vmatpush.msra.mxu0 %v524
      %588 = vmatpush.msra.mxu0 %v523
      %589 = vmatpush.msra.mxu0 %v522
      %590 = vmatpush.msra.mxu0 %v521
      %591 = vmatpush.msra.mxu0 %v520
      %592 = vmatmul.f32.gmra.mxu0 %v529
      %v593 = vpop.f32.mrf.mxu0
      %v594 = vadd.f32 0.0, %v593
      %595 = vmatmul.f32.gmra.mxu0 %v532
      %v596 = vpop.f32.mrf.mxu0
      %v597 = vadd.f32 0.0, %v596
      %598 = vmatmul.f32.gmra.mxu0 %v535
      %v599 = vpop.f32.mrf.mxu0
      %v600 = vadd.f32 0.0, %v599
      %601 = vmatmul.f32.gmra.mxu0 %v538
      %v602 = vpop.f32.mrf.mxu0
      %v603 = vadd.f32 0.0, %v602
      %604 = vmatmul.f32.gmra.mxu0 %v541
      %v605 = vpop.f32.mrf.mxu0
      %v606 = vadd.f32 0.0, %v605
      %607 = vmatmul.f32.gmra.mxu0 %v544
      %v608 = vpop.f32.mrf.mxu0
      %v609 = vadd.f32 0.0, %v608
      %610 = vmatmul.f32.gmra.mxu0 %v547
      %v611 = vpop.f32.mrf.mxu0
      %v612 = vadd.f32 0.0, %v611
      %613 = vmatmul.f32.gmra.mxu0 %v550
      %v614 = vpop.f32.mrf.mxu0
      %v615 = vadd.f32 0.0, %v614
      %616 = vmatmul.f32.gmra.mxu0 %v553
      %v617 = vpop.f32.mrf.mxu0
      %v618 = vadd.f32 0.0, %v617
      %619 = vmatmul.f32.gmra.mxu0 %v556
      %v620 = vpop.f32.mrf.mxu0
      %v621 = vadd.f32 0.0, %v620
      %622 = vmatmul.f32.gmra.mxu0 %v559
      %v623 = vpop.f32.mrf.mxu0
      %v624 = vadd.f32 0.0, %v623
      %625 = vmatmul.f32.gmra.mxu0 %v562
      %v626 = vpop.f32.mrf.mxu0
      %v627 = vadd.f32 0.0, %v626
      %628 = vmatmul.f32.gmra.mxu0 %v565
      %v629 = vpop.f32.mrf.mxu0
      %v630 = vadd.f32 0.0, %v629
      %631 = vmatmul.f32.gmra.mxu0 %v568
      %v632 = vpop.f32.mrf.mxu0
      %v633 = vadd.f32 0.0, %v632
      %634 = vmatmul.f32.gmra.mxu0 %v571
      %v635 = vpop.f32.mrf.mxu0
      %v636 = vadd.f32 0.0, %v635
      %637 = vmatmul.f32.gmra.mxu0 %v574
      %v638 = vpop.f32.mrf.mxu0
      %v639 = vadd.f32 0.0, %v638
      %640 = vdwg.mxu0
      %vm641 = vcmask 130048
      %v642 = vsel %vm641, %v594, -inf
      %v643 = vrot.slane %v642, 4
      %v644 = vmax.f32 %v642, %v643
      %v645 = vrot.slane %v644, 2
      %v646 = vmax.f32 %v644, %v645
      %v647 = vrot.slane %v646, 1
      %v648 = vmax.f32 %v646, %v647
      %v649 = vsel %vm641, %v597, -inf
      %v650 = vrot.slane %v649, 4
      %v651 = vmax.f32 %v649, %v650
      %v652 = vrot.slane %v651, 2
      %v653 = vmax.f32 %v651, %v652
      %v654 = vrot.slane %v653, 1
      %v655 = vmax.f32 %v653, %v654
      %v656 = vsel %vm641, %v600, -inf
      %v657 = vrot.slane %v656, 4
      %v658 = vmax.f32 %v656, %v657
      %v659 = vrot.slane %v658, 2
      %v660 = vmax.f32 %v658, %v659
      %v661 = vrot.slane %v660, 1
      %v662 = vmax.f32 %v660, %v661
      %v663 = vsel %vm641, %v603, -inf
      %v664 = vrot.slane %v663, 4
      %v665 = vmax.f32 %v663, %v664
      %v666 = vrot.slane %v665, 2
      %v667 = vmax.f32 %v665, %v666
      %v668 = vrot.slane %v667, 1
      %v669 = vmax.f32 %v667, %v668
      %v670 = vsel %vm641, %v606, -inf
      %v671 = vrot.slane %v670, 4
      %v672 = vmax.f32 %v670, %v671
      %v673 = vrot.slane %v672, 2
      %v674 = vmax.f32 %v672, %v673
      %v675 = vrot.slane %v674, 1
      %v676 = vmax.f32 %v674, %v675
      %v677 = vsel %vm641, %v609, -inf
      %v678 = vrot.slane %v677, 4
      %v679 = vmax.f32 %v677, %v678
      %v680 = vrot.slane %v679, 2
      %v681 = vmax.f32 %v679, %v680
      %v682 = vrot.slane %v681, 1
      %v683 = vmax.f32 %v681, %v682
      %v684 = vsel %vm641, %v612, -inf
      %v685 = vrot.slane %v684, 4
      %v686 = vmax.f32 %v684, %v685
      %v687 = vrot.slane %v686, 2
      %v688 = vmax.f32 %v686, %v687
      %v689 = vrot.slane %v688, 1
      %v690 = vmax.f32 %v688, %v689
      %v691 = vsel %vm641, %v615, -inf
      %v692 = vrot.slane %v691, 4
      %v693 = vmax.f32 %v691, %v692
      %v694 = vrot.slane %v693, 2
      %v695 = vmax.f32 %v693, %v694
      %v696 = vrot.slane %v695, 1
      %v697 = vmax.f32 %v695, %v696
      %v698 = vsel %vm641, %v618, -inf
      %v699 = vrot.slane %v698, 4
      %v700 = vmax.f32 %v698, %v699
      %v701 = vrot.slane %v700, 2
      %v702 = vmax.f32 %v700, %v701
      %v703 = vrot.slane %v702, 1
      %v704 = vmax.f32 %v702, %v703
      %v705 = vsel %vm641, %v621, -inf
      %v706 = vrot.slane %v705, 4
      %v707 = vmax.f32 %v705, %v706
      %v708 = vrot.slane %v707, 2
      %v709 = vmax.f32 %v707, %v708
      %v710 = vrot.slane %v709, 1
      %v711 = vmax.f32 %v709, %v710
      %v712 = vsel %vm641, %v624, -inf
      %v713 = vrot.slane %v712, 4
      %v714 = vmax.f32 %v712, %v713
      %v715 = vrot.slane %v714, 2
      %v716 = vmax.f32 %v714, %v715
      %v717 = vrot.slane %v716, 1
      %v718 = vmax.f32 %v716, %v717
      %v719 = vsel %vm641, %v627, -inf
      %v720 = vrot.slane %v719, 4
      %v721 = vmax.f32 %v719, %v720
      %v722 = vrot.slane %v721, 2
      %v723 = vmax.f32 %v721, %v722
      %v724 = vrot.slane %v723, 1
      %v725 = vmax.f32 %v723, %v724
      %v726 = vsel %vm641, %v630, -inf
      %v727 = vrot.slane %v726, 4
      %v728 = vmax.f32 %v726, %v727
      %v729 = vrot.slane %v728, 2
      %v730 = vmax.f32 %v728, %v729
      %v731 = vrot.slane %v730, 1
      %v732 = vmax.f32 %v730, %v731
      %v733 = vsel %vm641, %v633, -inf
      %v734 = vrot.slane %v733, 4
      %v735 = vmax.f32 %v733, %v734
      %v736 = vrot.slane %v735, 2
      %v737 = vmax.f32 %v735, %v736
      %v738 = vrot.slane %v737, 1
      %v739 = vmax.f32 %v737, %v738
      %v740 = vsel %vm641, %v636, -inf
      %v741 = vrot.slane %v740, 4
      %v742 = vmax.f32 %v740, %v741
      %v743 = vrot.slane %v742, 2
      %v744 = vmax.f32 %v742, %v743
      %v745 = vrot.slane %v744, 1
      %v746 = vmax.f32 %v744, %v745
      %v747 = vsel %vm641, %v639, -inf
      %v748 = vrot.slane %v747, 4
      %v749 = vmax.f32 %v747, %v748
      %v750 = vrot.slane %v749, 2
      %v751 = vmax.f32 %v749, %v750
      %v752 = vrot.slane %v751, 1
      %v753 = vmax.f32 %v751, %v752
      %v754 = vsub.f32 %v594, %v648
      %v755 = vsub.f32 %v597, %v655
      %v756 = vsub.f32 %v600, %v662
      %v757 = vsub.f32 %v603, %v669
      %v758 = vsub.f32 %v606, %v676
      %v759 = vsub.f32 %v609, %v683
      %v760 = vsub.f32 %v612, %v690
      %v761 = vsub.f32 %v615, %v697
      %v762 = vsub.f32 %v618, %v704
      %v763 = vsub.f32 %v621, %v711
      %v764 = vsub.f32 %v624, %v718
      %v765 = vsub.f32 %v627, %v725
      %v766 = vsub.f32 %v630, %v732
      %v767 = vsub.f32 %v633, %v739
      %v768 = vsub.f32 %v636, %v746
      %v769 = vsub.f32 %v639, %v753
      %v770 = vmul.f32 %v754, 1.442695
      %v771 = vpow.pop %v770
      %v772 = vmul.f32 %v755, 1.442695
      %v773 = vpow.pop %v772
      %v774 = vmul.f32 %v756, 1.442695
      %v775 = vpow.pop %v774
      %v776 = vmul.f32 %v757, 1.442695
      %v777 = vpow.pop %v776
      %v778 = vmul.f32 %v758, 1.442695
      %v779 = vpow.pop %v778
      %v780 = vmul.f32 %v759, 1.442695
      %v781 = vpow.pop %v780
      %v782 = vmul.f32 %v760, 1.442695
      %v783 = vpow.pop %v782
      %v784 = vmul.f32 %v761, 1.442695
      %v785 = vpow.pop %v784
      %v786 = vmul.f32 %v762, 1.442695
      %v787 = vpow.pop %v786
      %v788 = vmul.f32 %v763, 1.442695
      %v789 = vpow.pop %v788
      %v790 = vmul.f32 %v764, 1.442695
      %v791 = vpow.pop %v790
      %v792 = vmul.f32 %v765, 1.442695
      %v793 = vpow.pop %v792
      %v794 = vmul.f32 %v766, 1.442695
      %v795 = vpow.pop %v794
      %v796 = vmul.f32 %v767, 1.442695
      %v797 = vpow.pop %v796
      %v798 = vmul.f32 %v768, 1.442695
      %v799 = vpow.pop %v798
      %v800 = vmul.f32 %v769, 1.442695
      %v801 = vpow.pop %v800
      %v802 = vsel %vm641, %v771, 0.0
      %v803 = vrot.slane %v802, 4
      %v804 = vadd.f32 %v802, %v803
      %v805 = vrot.slane %v804, 2
      %v806 = vadd.f32 %v804, %v805
      %v807 = vrot.slane %v806, 1
      %v808 = vadd.f32 %v806, %v807
      %v809 = vsel %vm641, %v773, 0.0
      %v810 = vrot.slane %v809, 4
      %v811 = vadd.f32 %v809, %v810
      %v812 = vrot.slane %v811, 2
      %v813 = vadd.f32 %v811, %v812
      %v814 = vrot.slane %v813, 1
      %v815 = vadd.f32 %v813, %v814
      %v816 = vsel %vm641, %v775, 0.0
      %v817 = vrot.slane %v816, 4
      %v818 = vadd.f32 %v816, %v817
      %v819 = vrot.slane %v818, 2
      %v820 = vadd.f32 %v818, %v819
      %v821 = vrot.slane %v820, 1
      %v822 = vadd.f32 %v820, %v821
      %v823 = vsel %vm641, %v777, 0.0
      %v824 = vrot.slane %v823, 4
      %v825 = vadd.f32 %v823, %v824
      %v826 = vrot.slane %v825, 2
      %v827 = vadd.f32 %v825, %v826
      %v828 = vrot.slane %v827, 1
      %v829 = vadd.f32 %v827, %v828
      %v830 = vsel %vm641, %v779, 0.0
      %v831 = vrot.slane %v830, 4
      %v832 = vadd.f32 %v830, %v831
      %v833 = vrot.slane %v832, 2
      %v834 = vadd.f32 %v832, %v833
      %v835 = vrot.slane %v834, 1
      %v836 = vadd.f32 %v834, %v835
      %v837 = vsel %vm641, %v781, 0.0
      %v838 = vrot.slane %v837, 4
      %v839 = vadd.f32 %v837, %v838
      %v840 = vrot.slane %v839, 2
      %v841 = vadd.f32 %v839, %v840
      %v842 = vrot.slane %v841, 1
      %v843 = vadd.f32 %v841, %v842
      %v844 = vsel %vm641, %v783, 0.0
      %v845 = vrot.slane %v844, 4
      %v846 = vadd.f32 %v844, %v845
      %v847 = vrot.slane %v846, 2
      %v848 = vadd.f32 %v846, %v847
      %v849 = vrot.slane %v848, 1
      %v850 = vadd.f32 %v848, %v849
      %v851 = vsel %vm641, %v785, 0.0
      %v852 = vrot.slane %v851, 4
      %v853 = vadd.f32 %v851, %v852
      %v854 = vrot.slane %v853, 2
      %v855 = vadd.f32 %v853, %v854
      %v856 = vrot.slane %v855, 1
      %v857 = vadd.f32 %v855, %v856
      %v858 = vsel %vm641, %v787, 0.0
      %v859 = vrot.slane %v858, 4
      %v860 = vadd.f32 %v858, %v859
      %v861 = vrot.slane %v860, 2
      %v862 = vadd.f32 %v860, %v861
      %v863 = vrot.slane %v862, 1
      %v864 = vadd.f32 %v862, %v863
      %v865 = vsel %vm641, %v789, 0.0
      %v866 = vrot.slane %v865, 4
      %v867 = vadd.f32 %v865, %v866
      %v868 = vrot.slane %v867, 2
      %v869 = vadd.f32 %v867, %v868
      %v870 = vrot.slane %v869, 1
      %v871 = vadd.f32 %v869, %v870
      %v872 = vsel %vm641, %v791, 0.0
      %v873 = vrot.slane %v872, 4
      %v874 = vadd.f32 %v872, %v873
      %v875 = vrot.slane %v874, 2
      %v876 = vadd.f32 %v874, %v875
      %v877 = vrot.slane %v876, 1
      %v878 = vadd.f32 %v876, %v877
      %v879 = vsel %vm641, %v793, 0.0
      %v880 = vrot.slane %v879, 4
      %v881 = vadd.f32 %v879, %v880
      %v882 = vrot.slane %v881, 2
      %v883 = vadd.f32 %v881, %v882
      %v884 = vrot.slane %v883, 1
      %v885 = vadd.f32 %v883, %v884
      %v886 = vsel %vm641, %v795, 0.0
      %v887 = vrot.slane %v886, 4
      %v888 = vadd.f32 %v886, %v887
      %v889 = vrot.slane %v888, 2
      %v890 = vadd.f32 %v888, %v889
      %v891 = vrot.slane %v890, 1
      %v892 = vadd.f32 %v890, %v891
      %v893 = vsel %vm641, %v797, 0.0
      %v894 = vrot.slane %v893, 4
      %v895 = vadd.f32 %v893, %v894
      %v896 = vrot.slane %v895, 2
      %v897 = vadd.f32 %v895, %v896
      %v898 = vrot.slane %v897, 1
      %v899 = vadd.f32 %v897, %v898
      %v900 = vsel %vm641, %v799, 0.0
      %v901 = vrot.slane %v900, 4
      %v902 = vadd.f32 %v900, %v901
      %v903 = vrot.slane %v902, 2
      %v904 = vadd.f32 %v902, %v903
      %v905 = vrot.slane %v904, 1
      %v906 = vadd.f32 %v904, %v905
      %v907 = vsel %vm641, %v801, 0.0
      %v908 = vrot.slane %v907, 4
      %v909 = vadd.f32 %v907, %v908
      %v910 = vrot.slane %v909, 2
      %v911 = vadd.f32 %v909, %v910
      %v912 = vrot.slane %v911, 1
      %v913 = vadd.f32 %v911, %v912
      %v914 = vrcp.pop %v808
      %v915 = vrcp.pop %v815
      %v916 = vrcp.pop %v822
      %v917 = vrcp.pop %v829
      %v918 = vrcp.pop %v836
      %v919 = vrcp.pop %v843
      %v920 = vrcp.pop %v850
      %v921 = vrcp.pop %v857
      %v922 = vrcp.pop %v864
      %v923 = vrcp.pop %v871
      %v924 = vrcp.pop %v878
      %v925 = vrcp.pop %v885
      %v926 = vrcp.pop %v892
      %v927 = vrcp.pop %v899
      %v928 = vrcp.pop %v906
      %v929 = vrcp.pop %v913
      %v930 = vmul.f32 %v771, %v914
      %v931 = vmul.f32 %v773, %v915
      %v932 = vmul.f32 %v775, %v916
      %v933 = vmul.f32 %v777, %v917
      %v934 = vmul.f32 %v779, %v918
      %v935 = vmul.f32 %v781, %v919
      %v936 = vmul.f32 %v783, %v920
      %v937 = vmul.f32 %v785, %v921
      %v938 = vmul.f32 %v787, %v922
      %v939 = vmul.f32 %v789, %v923
      %v940 = vmul.f32 %v791, %v924
      %v941 = vmul.f32 %v793, %v925
      %v942 = vmul.f32 %v795, %v926
      %v943 = vmul.f32 %v797, %v927
      %v944 = vmul.f32 %v799, %v928
      %v945 = vmul.f32 %v801, %v929
      %v946 = vld [vmem:[%s5] sm:$0xff]
      %v947 = vld [vmem:[%s5 + $0x8] sm:$0xff]
      %v949 = vsel %vm641, %v930, 0
      %v952 = vsel %vm641, %v931, 0
      %v955 = vsel %vm641, %v932, 0
      %v958 = vsel %vm641, %v933, 0
      %v961 = vsel %vm641, %v934, 0
      %v964 = vsel %vm641, %v935, 0
      %v967 = vsel %vm641, %v936, 0
      %v970 = vsel %vm641, %v937, 0
      %v973 = vsel %vm641, %v938, 0
      %v976 = vsel %vm641, %v939, 0
      %v979 = vsel %vm641, %v940, 0
      %v982 = vsel %vm641, %v941, 0
      %v985 = vsel %vm641, %v942, 0
      %v988 = vsel %vm641, %v943, 0
      %v991 = vsel %vm641, %v944, 0
      %v994 = vsel %vm641, %v945, 0
      %996 = vmatpush.msra.mxu0 0.0
      %997 = vmatpush.msra.mxu0 0.0
      %998 = vmatpush.msra.mxu0 0.0
      %999 = vmatpush.msra.mxu0 0.0
      %1000 = vmatpush.msra.mxu0 0.0
      %1001 = vmatpush.msra.mxu0 0.0
      %1002 = vmatpush.msra.mxu0 0.0
      %1003 = vmatpush.msra.mxu0 0.0
      %1004 = vmatpush.msra.mxu0 0.0
      %1005 = vmatpush.msra.mxu0 0.0
      %1006 = vmatpush.msra.mxu0 0.0
      %1007 = vmatpush.msra.mxu0 0.0
      %1008 = vmatpush.msra.mxu0 0.0
      %1009 = vmatpush.msra.mxu0 0.0
      %1010 = vmatpush.msra.mxu0 %v947
      %1011 = vmatpush.msra.mxu0 %v946
      %1012 = vmatmul.f32.gmra.mxu0 %v949
      %v1013 = vpop.f32.mrf.mxu0
      %v1014 = vadd.f32 0.0, %v1013
      %1015 = vmatmul.f32.gmra.mxu0 %v952
      %v1016 = vpop.f32.mrf.mxu0
      %v1017 = vadd.f32 0.0, %v1016
      %1018 = vmatmul.f32.gmra.mxu0 %v955
      %v1019 = vpop.f32.mrf.mxu0
      %v1020 = vadd.f32 0.0, %v1019
      %1021 = vmatmul.f32.gmra.mxu0 %v958
      %v1022 = vpop.f32.mrf.mxu0
      %v1023 = vadd.f32 0.0, %v1022
      %1024 = vmatmul.f32.gmra.mxu0 %v961
      %v1025 = vpop.f32.mrf.mxu0
      %v1026 = vadd.f32 0.0, %v1025
      %1027 = vmatmul.f32.gmra.mxu0 %v964
      %v1028 = vpop.f32.mrf.mxu0
      %v1029 = vadd.f32 0.0, %v1028
      %1030 = vmatmul.f32.gmra.mxu0 %v967
      %v1031 = vpop.f32.mrf.mxu0
      %v1032 = vadd.f32 0.0, %v1031
      %1033 = vmatmul.f32.gmra.mxu0 %v970
      %v1034 = vpop.f32.mrf.mxu0
      %v1035 = vadd.f32 0.0, %v1034
      %1036 = vmatmul.f32.gmra.mxu0 %v973
      %v1037 = vpop.f32.mrf.mxu0
      %v1038 = vadd.f32 0.0, %v1037
      %1039 = vmatmul.f32.gmra.mxu0 %v976
      %v1040 = vpop.f32.mrf.mxu0
      %v1041 = vadd.f32 0.0, %v1040
      %1042 = vmatmul.f32.gmra.mxu0 %v979
      %v1043 = vpop.f32.mrf.mxu0
      %v1044 = vadd.f32 0.0, %v1043
      %1045 = vmatmul.f32.gmra.mxu0 %v982
      %v1046 = vpop.f32.mrf.mxu0
      %v1047 = vadd.f32 0.0, %v1046
      %1048 = vmatmul.f32.gmra.mxu0 %v985
      %v1049 = vpop.f32.mrf.mxu0
      %v1050 = vadd.f32 0.0, %v1049
      %1051 = vmatmul.f32.gmra.mxu0 %v988
      %v1052 = vpop.f32.mrf.mxu0
      %v1053 = vadd.f32 0.0, %v1052
      %1054 = vmatmul.f32.gmra.mxu0 %v991
      %v1055 = vpop.f32.mrf.mxu0
      %v1056 = vadd.f32 0.0, %v1055
      %1057 = vmatmul.f32.gmra.mxu0 %v994
      %v1058 = vpop.f32.mrf.mxu0
      %v1059 = vadd.f32 0.0, %v1058
      %1060 = vdwg.mxu0
      %v1061 = vmul.f32 %v1014, %v456
      %v1062 = vmul.f32 %v1017, %v459
      %v1063 = vmul.f32 %v1020, %v462
      %v1064 = vmul.f32 %v1023, %v465
      %v1065 = vmul.f32 %v1026, %v468
      %v1066 = vmul.f32 %v1029, %v471
      %v1067 = vmul.f32 %v1032, %v474
      %v1068 = vmul.f32 %v1035, %v477
      %v1069 = vmul.f32 %v1038, %v480
      %v1070 = vmul.f32 %v1041, %v483
      %v1071 = vmul.f32 %v1044, %v486
      %v1072 = vmul.f32 %v1047, %v489
      %v1073 = vmul.f32 %v1050, %v492
      %v1074 = vmul.f32 %v1053, %v495
      %v1075 = vmul.f32 %v1056, %v498
      %v1076 = vmul.f32 %v1059, %v501
      %v1077 = vsel %vm315, %v1061, 0.0
      %v1078 = vrot.slane %v1077, 4
      %v1079 = vadd.f32 %v1077, %v1078
      %v1080 = vrot.slane %v1079, 2
      %v1081 = vadd.f32 %v1079, %v1080
      %v1082 = vrot.slane %v1081, 1
      %v1083 = vadd.f32 %v1081, %v1082
      %v1084 = vsel %vm315, %v1062, 0.0
      %v1085 = vrot.slane %v1084, 4
      %v1086 = vadd.f32 %v1084, %v1085
      %v1087 = vrot.slane %v1086, 2
      %v1088 = vadd.f32 %v1086, %v1087
      %v1089 = vrot.slane %v1088, 1
      %v1090 = vadd.f32 %v1088, %v1089
      %v1091 = vsel %vm315, %v1063, 0.0
      %v1092 = vrot.slane %v1091, 4
      %v1093 = vadd.f32 %v1091, %v1092
      %v1094 = vrot.slane %v1093, 2
      %v1095 = vadd.f32 %v1093, %v1094
      %v1096 = vrot.slane %v1095, 1
      %v1097 = vadd.f32 %v1095, %v1096
      %v1098 = vsel %vm315, %v1064, 0.0
      %v1099 = vrot.slane %v1098, 4
      %v1100 = vadd.f32 %v1098, %v1099
      %v1101 = vrot.slane %v1100, 2
      %v1102 = vadd.f32 %v1100, %v1101
      %v1103 = vrot.slane %v1102, 1
      %v1104 = vadd.f32 %v1102, %v1103
      %v1105 = vsel %vm315, %v1065, 0.0
      %v1106 = vrot.slane %v1105, 4
      %v1107 = vadd.f32 %v1105, %v1106
      %v1108 = vrot.slane %v1107, 2
      %v1109 = vadd.f32 %v1107, %v1108
      %v1110 = vrot.slane %v1109, 1
      %v1111 = vadd.f32 %v1109, %v1110
      %v1112 = vsel %vm315, %v1066, 0.0
      %v1113 = vrot.slane %v1112, 4
      %v1114 = vadd.f32 %v1112, %v1113
      %v1115 = vrot.slane %v1114, 2
      %v1116 = vadd.f32 %v1114, %v1115
      %v1117 = vrot.slane %v1116, 1
      %v1118 = vadd.f32 %v1116, %v1117
      %v1119 = vsel %vm315, %v1067, 0.0
      %v1120 = vrot.slane %v1119, 4
      %v1121 = vadd.f32 %v1119, %v1120
      %v1122 = vrot.slane %v1121, 2
      %v1123 = vadd.f32 %v1121, %v1122
      %v1124 = vrot.slane %v1123, 1
      %v1125 = vadd.f32 %v1123, %v1124
      %v1126 = vsel %vm315, %v1068, 0.0
      %v1127 = vrot.slane %v1126, 4
      %v1128 = vadd.f32 %v1126, %v1127
      %v1129 = vrot.slane %v1128, 2
      %v1130 = vadd.f32 %v1128, %v1129
      %v1131 = vrot.slane %v1130, 1
      %v1132 = vadd.f32 %v1130, %v1131
      %v1133 = vsel %vm315, %v1069, 0.0
      %v1134 = vrot.slane %v1133, 4
      %v1135 = vadd.f32 %v1133, %v1134
      %v1136 = vrot.slane %v1135, 2
      %v1137 = vadd.f32 %v1135, %v1136
      %v1138 = vrot.slane %v1137, 1
      %v1139 = vadd.f32 %v1137, %v1138
      %v1140 = vsel %vm315, %v1070, 0.0
      %v1141 = vrot.slane %v1140, 4
      %v1142 = vadd.f32 %v1140, %v1141
      %v1143 = vrot.slane %v1142, 2
      %v1144 = vadd.f32 %v1142, %v1143
      %v1145 = vrot.slane %v1144, 1
      %v1146 = vadd.f32 %v1144, %v1145
      %v1147 = vsel %vm315, %v1071, 0.0
      %v1148 = vrot.slane %v1147, 4
      %v1149 = vadd.f32 %v1147, %v1148
      %v1150 = vrot.slane %v1149, 2
      %v1151 = vadd.f32 %v1149, %v1150
      %v1152 = vrot.slane %v1151, 1
      %v1153 = vadd.f32 %v1151, %v1152
      %v1154 = vsel %vm315, %v1072, 0.0
      %v1155 = vrot.slane %v1154, 4
      %v1156 = vadd.f32 %v1154, %v1155
      %v1157 = vrot.slane %v1156, 2
      %v1158 = vadd.f32 %v1156, %v1157
      %v1159 = vrot.slane %v1158, 1
      %v1160 = vadd.f32 %v1158, %v1159
      %v1161 = vsel %vm315, %v1073, 0.0
      %v1162 = vrot.slane %v1161, 4
      %v1163 = vadd.f32 %v1161, %v1162
      %v1164 = vrot.slane %v1163, 2
      %v1165 = vadd.f32 %v1163, %v1164
      %v1166 = vrot.slane %v1165, 1
      %v1167 = vadd.f32 %v1165, %v1166
      %v1168 = vsel %vm315, %v1074, 0.0
      %v1169 = vrot.slane %v1168, 4
      %v1170 = vadd.f32 %v1168, %v1169
      %v1171 = vrot.slane %v1170, 2
      %v1172 = vadd.f32 %v1170, %v1171
      %v1173 = vrot.slane %v1172, 1
      %v1174 = vadd.f32 %v1172, %v1173
      %v1175 = vsel %vm315, %v1075, 0.0
      %v1176 = vrot.slane %v1175, 4
      %v1177 = vadd.f32 %v1175, %v1176
      %v1178 = vrot.slane %v1177, 2
      %v1179 = vadd.f32 %v1177, %v1178
      %v1180 = vrot.slane %v1179, 1
      %v1181 = vadd.f32 %v1179, %v1180
      %v1182 = vsel %vm315, %v1076, 0.0
      %v1183 = vrot.slane %v1182, 4
      %v1184 = vadd.f32 %v1182, %v1183
      %v1185 = vrot.slane %v1184, 2
      %v1186 = vadd.f32 %v1184, %v1185
      %v1187 = vrot.slane %v1186, 1
      %v1188 = vadd.f32 %v1186, %v1187
      %vm1205 = vcmask 1041409
      %v1206 = vsel %vm1205, %v1090, %v1083
      %vm1207 = vcmask 1042434
      %v1208 = vsel %vm1207, %v1097, %v1206
      %vm1209 = vcmask 1043459
      %v1210 = vsel %vm1209, %v1104, %v1208
      %vm1211 = vcmask 1044484
      %v1212 = vsel %vm1211, %v1111, %v1210
      %vm1213 = vcmask 1045509
      %v1214 = vsel %vm1213, %v1118, %v1212
      %vm1215 = vcmask 1046534
      %v1216 = vsel %vm1215, %v1125, %v1214
      %vm1217 = vcmask 1047559
      %v1218 = vsel %vm1217, %v1132, %v1216
      %v1219 = vsel %vm1205, %v1146, %v1139
      %v1220 = vsel %vm1207, %v1153, %v1219
      %v1221 = vsel %vm1209, %v1160, %v1220
      %v1222 = vsel %vm1211, %v1167, %v1221
      %v1223 = vsel %vm1213, %v1174, %v1222
      %v1224 = vsel %vm1215, %v1181, %v1223
      %v1225 = vsel %vm1217, %v1188, %v1224
      %v1228 = vadd.f32 %v503, %v1218
      %v1229 = vadd.f32 %v503, %v1225
      %v1230 = vperm.slane %v302, 0
      %v1231 = vmul.f32 %v1228, %v1230
      %v1232 = vmul.f32 %v1229, %v1230
      %v1233 = vperm.slane %v303, 0
      %v1234 = vadd.f32 %v1231, %v1233
      %v1235 = vadd.f32 %v1232, %v1233
      %v1236 = vld [vmem:[%s3] sm:$0xff]
      %v1237 = vld [vmem:[%s3 + $0x8] sm:$0xff]
      %v1238 = vld [vmem:[%s3 + $0x10] sm:$0xff]
      %v1239 = vld [vmem:[%s3 + $0x18] sm:$0xff]
      %v1240 = vld [vmem:[%s3 + $0x20] sm:$0xff]
      %v1241 = vld [vmem:[%s3 + $0x28] sm:$0xff]
      %v1242 = vld [vmem:[%s3 + $0x30] sm:$0xff]
      %v1243 = vld [vmem:[%s3 + $0x38] sm:$0xff]
      %v1244 = vperm.slane %v300, 0
      %v1246 = vsel %vm315, %v1234, 0
      %v1249 = vsel %vm315, %v1235, 0
      %1251 = vmatpush.msra.mxu0 0.0
      %1252 = vmatpush.msra.mxu0 0.0
      %1253 = vmatpush.msra.mxu0 0.0
      %1254 = vmatpush.msra.mxu0 0.0
      %1255 = vmatpush.msra.mxu0 0.0
      %1256 = vmatpush.msra.mxu0 0.0
      %1257 = vmatpush.msra.mxu0 0.0
      %1258 = vmatpush.msra.mxu0 0.0
      %1259 = vmatpush.msra.mxu0 %v1243
      %1260 = vmatpush.msra.mxu0 %v1242
      %1261 = vmatpush.msra.mxu0 %v1241
      %1262 = vmatpush.msra.mxu0 %v1240
      %1263 = vmatpush.msra.mxu0 %v1239
      %1264 = vmatpush.msra.mxu0 %v1238
      %1265 = vmatpush.msra.mxu0 %v1237
      %1266 = vmatpush.msra.mxu0 %v1236
      %1267 = vmatmul.f32.gmra.mxu0 %v1246
      %v1268 = vpop.f32.mrf.mxu0
      %v1269 = vadd.f32 %v1244, %v1268
      %1270 = vmatmul.f32.gmra.mxu0 %v1249
      %v1271 = vpop.f32.mrf.mxu0
      %v1272 = vadd.f32 %v1244, %v1271
      %1273 = vdwg.mxu0
      %v1274 = vmax.f32 %v1269, 0.0
      %v1275 = vmax.f32 %v1272, 0.0
      %v1276 = vadd.f32 %v1234, %v1274
      %v1277 = vadd.f32 %v1235, %v1275
      %v1278 = vperm.slane %v304, 0
      %v1279 = vmul.f32 %v1276, %v1278
      %v1280 = vmul.f32 %v1277, %v1278
      %v1281 = vperm.slane %v305, 0
      %v1282 = vadd.f32 %v1279, %v1281
      %v1283 = vadd.f32 %v1280, %v1281
      %1284 = vst.msk [vmem:[%s280] sm:$0xff] %vm315, %v1282
      %1285 = vst.msk [vmem:[%s280 + $0x8] sm:$0xff] %vm315, %v1283
      %s1286 = smul.u32 2, %s18
      %p1287 = scmp.lt.s32.totalorder %s1286, 3
      %s1288 = scalar_select %p1287, %s1286, 3
      %s1289 = smul.addr %s1288, 8
      %s1290 = scalar_lea.vmem %s7, %s1289
      // Predicated region
      $region49: #{transformer_router_forward.1} parent=47 // pred_check
        %p1291 = pneg %p188
      $region50: #{transformer_router_forward.1} parent=47 // pred_check_branch
        %1293 = sbr.rel (%p1291) target = $region52
      $region51: #{transformer_router_forward.1} parent=47 // pred_region
        %s1294 = smul.u32 2, %s18
      $region52: #{transformer_router_forward.1} parent=47 // pred_fallthru
        _
    $region48: #{transformer_router_forward.1} parent=5 // pred_fallthru
      _
    %p1295 = scmp.le.s32.totalorder 2, %s13
    // Predicated region
    $region53: #{transformer_router_forward.1} parent=5 // pred_check
      %p1296 = pneg %p1295
    $region54: #{transformer_router_forward.1} parent=5 // pred_check_branch
      %1298 = sbr.rel (%p1296) target = $region56
    $region55: #{transformer_router_forward.1} parent=5 // pred_region
      %s1299 = ssub.s32 %s13, 2
      // Predicated region
      $region57: #{transformer_router_forward.1} parent=55 // pred_check
        %p1300 = pneg %p194
      $region58: #{transformer_router_forward.1} parent=55 // pred_check_branch
        %1302 = sbr.rel (%p1300) target = $region60
      $region59: #{transformer_router_forward.1} parent=55 // pred_region
        %s1303 = smul.u32 2, %s19
        %p1304 = scmp.lt.s32.totalorder %s1303, 3
        %s1305 = scalar_select %p1304, %s1303, 3
        %s1306 = smul.addr %s1305, 8
        %s1307 = scalar_lea.vmem %s7, %s1306
      $region60: #{transformer_router_forward.1} parent=55 // pred_fallthru
        _
    $region56: #{transformer_router_forward.1} parent=5 // pred_fallthru
      _
  $region6: #{transformer_router_forward.1} parent=0 // loop_footer
    %s17 = sadd.s32 1, %s13
  $region7: #{transformer_router_forward.1} parent=0 // loop_footer_branch
    %12 = sbr.rel target = $region3
  $region8: #{transformer_router_forward.1} parent=0 // loop_exit
    _

</llo_original>
